<compile_context>
chip_gen: v7x
topology: tpu7x:2x2x1
jax: 0.10.0
libtpu: 0.0.40
codegen_flags: <defaults>
</compile_context>

<pallas_src>
import jax
import jax.numpy as jnp
from jax.experimental import pallas as pl
from jax.experimental.pallas import tpu as pltpu


def _critic_mlp_kernel(x_ref,
                       w1_ref, b1_ref,
                       w2_ref, b2_ref,
                       w3_ref, b3_ref,
                       w4_ref, b4_ref,
                       o_ref):
    # x_ref: (TILE_B, H) f32 CLS embeddings for this grid step.
    x = x_ref[...].astype(jnp.bfloat16)

    h = jnp.dot(x, w1_ref[...], preferred_element_type=jnp.float32) + b1_ref[...]
    h = jnp.maximum(h, 0.0)

    h = jnp.dot(h.astype(jnp.bfloat16), w2_ref[...],
                preferred_element_type=jnp.float32) + b2_ref[...]
    h = jnp.maximum(h, 0.0)

    h = jnp.dot(h.astype(jnp.bfloat16), w3_ref[...],
                preferred_element_type=jnp.float32) + b3_ref[...]
    h = jnp.maximum(h, 0.0)

    # Final layer has a single output column: broadcast multiply (VPU) +
    # lane reduction (XLU) instead of an N=1 MXU matmul.
    out = jnp.sum(h * w4_ref[...], axis=-1, keepdims=True) + b4_ref[...]
    o_ref[...] = out.astype(o_ref.dtype)


def critic_forward(last_hidden_state, params, *, tile_b=256):
    """last_hidden_state: (B, S, H) float32.  Returns logits (B, 1) float32."""
    B, S, H = last_hidden_state.shape
    (w1, b1), (w2, b2), (w3, b3), (w4, b4) = params

    # MXU operands in bf16 (accumulation stays f32 inside the kernel).  The
    # final-layer weight is reshaped to a (1, H//16) row for the VPU reduce.
    w1b = w1.astype(jnp.bfloat16)
    w2b = w2.astype(jnp.bfloat16)
    w3b = w3.astype(jnp.bfloat16)
    w4_row = w4.reshape(1, -1).astype(jnp.float32)

    # Batch tile: clamp to B (a block equal to the full batch satisfies the
    # layout rules even when B is not a multiple of 8).  Partial trailing
    # blocks are handled by Pallas: padding rows read garbage, their writes
    # are clipped, and every row is computed independently, so this is safe.
    tile_b = max(1, min(tile_b, B))
    grid = (pl.cdiv(B, tile_b),)

    # Fuse the CLS gather into the x BlockSpec: view (B, S, H) as (B, S*H)
    # (free for the default row-major layout) and read only the first H lanes
    # of each row.  Needs H % 128 == 0 for the lane-tiling rule; otherwise
    # fall back to a small XLA slice of the CLS token.
    if H % 128 == 0 or S == 1:
        x_in = last_hidden_state.reshape(B, S * H)
    else:
        x_in = last_hidden_state[:, 0, :]
    x_spec = pl.BlockSpec((tile_b, H), lambda i: (i, 0))

    def resident(arr):
        # Full-array block whose block index never changes -> DMA'd once,
        # stays VMEM-resident across all grid steps.
        return pl.BlockSpec(arr.shape, lambda i: (0, 0))

    dims = (H, H // 2, H // 4, H // 16, 1)
    flops = 2 * B * sum(dims[i] * dims[i + 1] for i in range(4))
    bytes_accessed = (
        B * H * 4                                            # CLS rows
        + sum(int(w.size) * 2 for w in (w1b, w2b, w3b))      # bf16 weights
        + int(w4_row.size) * 4
        + sum(int(b.size) * 4 for b in (b1, b2, b3, b4))
        + B * 4)                                             # logits
    cost = pl.CostEstimate(flops=flops, transcendentals=0,
                           bytes_accessed=int(bytes_accessed))

    return pl.pallas_call(
        _critic_mlp_kernel,
        out_shape=jax.ShapeDtypeStruct((B, 1), jnp.float32),
        grid=grid,
        in_specs=[x_spec,
                  resident(w1b), resident(b1),
                  resident(w2b), resident(b2),
                  resident(w3b), resident(b3),
                  resident(w4_row), resident(b4)],
        out_specs=pl.BlockSpec((tile_b, 1), lambda i: (i, 0)),
        compiler_params=pltpu.CompilerParams(
            dimension_semantics=("parallel",)),
        cost_estimate=cost,
    )(x_in, w1b, b1, w2b, b2, w3b, b3, w4_row, b4)


def init_params(key, hidden_size):
    """Deterministic synthetic init of the 4 Linear layers.

    Weight layout is (in, out) so the kernel computes x @ W + b (equivalent to
    torch.nn.Linear's x @ W.T + b); biases are (1, out) for batch broadcast.
    """
    dims = [hidden_size, hidden_size // 2, hidden_size // 4,
            hidden_size // 16, 1]
    params = []
    for i in range(4):
        key, kw, kb = jax.random.split(key, 3)
        fan_in = dims[i]
        bound = 1.0 / (fan_in ** 0.5)
        w = jax.random.uniform(kw, (dims[i], dims[i + 1]), jnp.float32,
                               minval=-bound, maxval=bound)
        b = jax.random.uniform(kb, (1, dims[i + 1]), jnp.float32,
                               minval=-bound, maxval=bound)
        params.append((w, b))
    return params


def reference_forward(last_hidden_state, params):
    """Pure-JAX reference mirroring the kernel math (bf16 inputs, f32 accum)."""
    (w1, b1), (w2, b2), (w3, b3), (w4, b4) = params
    h = last_hidden_state[:, 0, :]
    for w, b in ((w1, b1), (w2, b2), (w3, b3)):
        h = jnp.dot(h.astype(jnp.bfloat16), w.astype(jnp.bfloat16),
                    preferred_element_type=jnp.float32) + b
        h = jnp.maximum(h, 0.0)
    return jnp.sum(h * w4.reshape(1, -1), axis=-1, keepdims=True) + b4


if __name__ == "__main__":
    key = jax.random.PRNGKey(0)

    # Small shapes; H plays the role of the ProtBERT hidden size (real model
    # uses 1024).  H multiple of 128 so the fused CLS BlockSpec is lane-legal.
    B, S, H = 2, 8, 128
    key, kx = jax.random.split(key)
    last_hidden_state = jax.random.normal(kx, (B, S, H), jnp.float32)
    params = init_params(key, H)

    logits = critic_forward(last_hidden_state, params)
    jax.block_until_ready(logits)
    ref = reference_forward(last_hidden_state, params)
    assert logits.shape == (B, 1)
    assert jnp.allclose(logits, ref, atol=1e-2, rtol=1e-2), (logits, ref)

    # Multi-step grid with a partial trailing block to exercise pipelining and
    # weight residency across steps.
    B2, S2 = 20, 4
    key, kx2 = jax.random.split(key)
    hs2 = jax.random.normal(kx2, (B2, S2, H), jnp.float32)
    logits2 = critic_forward(hs2, params, tile_b=8)
    jax.block_until_ready(logits2)
    ref2 = reference_forward(hs2, params)
    assert logits2.shape == (B2, 1)
    assert jnp.allclose(logits2, ref2, atol=1e-2, rtol=1e-2), (logits2, ref2)

    print("KERNEL_OK")
</pallas_src>

<mosaic_0001>
module attributes {stable_mosaic.version = 11 : i64} {
  func.func @_critic_mlp_kernel(%arg0: i32, %arg1: memref<2x128xf32, #tpu.memory_space<vmem>>, %arg2: memref<128x64xbf16, #tpu.memory_space<vmem>>, %arg3: memref<1x64xf32, #tpu.memory_space<vmem>>, %arg4: memref<64x32xbf16, #tpu.memory_space<vmem>>, %arg5: memref<1x32xf32, #tpu.memory_space<vmem>>, %arg6: memref<32x8xbf16, #tpu.memory_space<vmem>>, %arg7: memref<1x8xf32, #tpu.memory_space<vmem>>, %arg8: memref<1x8xf32, #tpu.memory_space<vmem>>, %arg9: memref<1x1xf32, #tpu.memory_space<vmem>>, %arg10: memref<2x1xf32, #tpu.memory_space<vmem>>) attributes {dimension_semantics = [#tpu.dimension_semantics<parallel>], iteration_bounds = array<i64: 1>, scalar_prefetch = 0 : i64, scratch_operands = 0 : i64, tpu.core_type = #tpu.core_type<tc>, window_params = [{transform_indices = @transform_0, window_bounds = array<i64: 2, 128>}, {pipeline_mode = #tpu.pipeline_mode<synchronous>, transform_indices = @transform_1, window_bounds = array<i64: 128, 64>}, {pipeline_mode = #tpu.pipeline_mode<synchronous>, transform_indices = @transform_2, window_bounds = array<i64: 1, 64>}, {pipeline_mode = #tpu.pipeline_mode<synchronous>, transform_indices = @transform_3, window_bounds = array<i64: 64, 32>}, {pipeline_mode = #tpu.pipeline_mode<synchronous>, transform_indices = @transform_4, window_bounds = array<i64: 1, 32>}, {pipeline_mode = #tpu.pipeline_mode<synchronous>, transform_indices = @transform_5, window_bounds = array<i64: 32, 8>}, {pipeline_mode = #tpu.pipeline_mode<synchronous>, transform_indices = @transform_6, window_bounds = array<i64: 1, 8>}, {pipeline_mode = #tpu.pipeline_mode<synchronous>, transform_indices = @transform_7, window_bounds = array<i64: 1, 8>}, {pipeline_mode = #tpu.pipeline_mode<synchronous>, transform_indices = @transform_8, window_bounds = array<i64: 1, 1>}, {transform_indices = @transform_9, window_bounds = array<i64: 2, 1>}]} {
    %c0 = arith.constant 0 : index
    %c0_0 = arith.constant 0 : index
    %0 = vector.load %arg1[%c0, %c0_0] : memref<2x128xf32, #tpu.memory_space<vmem>>, vector<2x128xf32>
    %1 = arith.truncf %0 : vector<2x128xf32> to vector<2x128xbf16>
    %c0_1 = arith.constant 0 : index
    %c0_2 = arith.constant 0 : index
    %2 = vector.load %arg2[%c0_1, %c0_2] : memref<128x64xbf16, #tpu.memory_space<vmem>>, vector<128x64xbf16>
    %cst = arith.constant dense<0.000000e+00> : vector<2x64xf32>
    %3 = tpu.matmul %1, %2, %cst {dimension_numbers = #tpu.dot_dimension_numbers<[1], [0], [0], [1], [0, 0, 1, 1], [], []>} : vector<2x128xbf16>, vector<128x64xbf16>, vector<2x64xf32> -> vector<2x64xf32>
    %c0_3 = arith.constant 0 : index
    %c0_4 = arith.constant 0 : index
    %4 = vector.load %arg3[%c0_3, %c0_4] : memref<1x64xf32, #tpu.memory_space<vmem>>, vector<1x64xf32>
    %5 = vector.broadcast %4 : vector<1x64xf32> to vector<2x64xf32>
    %6 = arith.addf %3, %5 : vector<2x64xf32>
    %cst_5 = arith.constant 0.000000e+00 : f32
    %7 = vector.broadcast %cst_5 : f32 to vector<2x64xf32>
    %8 = arith.maximumf %6, %7 : vector<2x64xf32>
    %9 = arith.truncf %8 : vector<2x64xf32> to vector<2x64xbf16>
    %c0_6 = arith.constant 0 : index
    %c0_7 = arith.constant 0 : index
    %10 = vector.load %arg4[%c0_6, %c0_7] : memref<64x32xbf16, #tpu.memory_space<vmem>>, vector<64x32xbf16>
    %cst_8 = arith.constant dense<0.000000e+00> : vector<2x32xf32>
    %11 = tpu.matmul %9, %10, %cst_8 {dimension_numbers = #tpu.dot_dimension_numbers<[1], [0], [0], [1], [0, 0, 1, 1], [], []>} : vector<2x64xbf16>, vector<64x32xbf16>, vector<2x32xf32> -> vector<2x32xf32>
    %c0_9 = arith.constant 0 : index
    %c0_10 = arith.constant 0 : index
    %12 = vector.load %arg5[%c0_9, %c0_10] : memref<1x32xf32, #tpu.memory_space<vmem>>, vector<1x32xf32>
    %13 = vector.broadcast %12 : vector<1x32xf32> to vector<2x32xf32>
    %14 = arith.addf %11, %13 : vector<2x32xf32>
    %cst_11 = arith.constant 0.000000e+00 : f32
    %15 = vector.broadcast %cst_11 : f32 to vector<2x32xf32>
    %16 = arith.maximumf %14, %15 : vector<2x32xf32>
    %17 = arith.truncf %16 : vector<2x32xf32> to vector<2x32xbf16>
    %c0_12 = arith.constant 0 : index
    %c0_13 = arith.constant 0 : index
    %18 = vector.load %arg6[%c0_12, %c0_13] : memref<32x8xbf16, #tpu.memory_space<vmem>>, vector<32x8xbf16>
    %cst_14 = arith.constant dense<0.000000e+00> : vector<2x8xf32>
    %19 = tpu.matmul %17, %18, %cst_14 {dimension_numbers = #tpu.dot_dimension_numbers<[1], [0], [0], [1], [0, 0, 1, 1], [], []>} : vector<2x32xbf16>, vector<32x8xbf16>, vector<2x8xf32> -> vector<2x8xf32>
    %c0_15 = arith.constant 0 : index
    %c0_16 = arith.constant 0 : index
    %20 = vector.load %arg7[%c0_15, %c0_16] : memref<1x8xf32, #tpu.memory_space<vmem>>, vector<1x8xf32>
    %21 = vector.broadcast %20 : vector<1x8xf32> to vector<2x8xf32>
    %22 = arith.addf %19, %21 : vector<2x8xf32>
    %cst_17 = arith.constant 0.000000e+00 : f32
    %23 = vector.broadcast %cst_17 : f32 to vector<2x8xf32>
    %24 = arith.maximumf %22, %23 : vector<2x8xf32>
    %c0_18 = arith.constant 0 : index
    %c0_19 = arith.constant 0 : index
    %25 = vector.load %arg8[%c0_18, %c0_19] : memref<1x8xf32, #tpu.memory_space<vmem>>, vector<1x8xf32>
    %26 = vector.broadcast %25 : vector<1x8xf32> to vector<2x8xf32>
    %27 = arith.mulf %24, %26 : vector<2x8xf32>
    %cst_20 = arith.constant dense<0.000000e+00> : vector<2xf32>
    %28 = vector.multi_reduction <add>, %27, %cst_20 [1] : vector<2x8xf32> to vector<2xf32>
    %29 = vector.shape_cast %28 : vector<2xf32> to vector<2x1xf32>
    %c0_21 = arith.constant 0 : index
    %c0_22 = arith.constant 0 : index
    %30 = vector.load %arg9[%c0_21, %c0_22] : memref<1x1xf32, #tpu.memory_space<vmem>>, vector<1x1xf32>
    %31 = vector.broadcast %30 : vector<1x1xf32> to vector<2x1xf32>
    %32 = arith.addf %29, %31 : vector<2x1xf32>
    %c0_23 = arith.constant 0 : index
    %c0_24 = arith.constant 0 : index
    %33 = vector.load %arg10[%c0_23, %c0_24] : memref<2x1xf32, #tpu.memory_space<vmem>>, vector<2x1xf32>
    tpu.vector_store %arg10[%c0_23, %c0_24], %32 {strides = array<i32>} : memref<2x1xf32, #tpu.memory_space<vmem>>, vector<2x1xf32>,
    return
  }
  func.func @transform_0(%arg0: i32) -> (i32, i32) {
    %c0_i32 = arith.constant 0 : i32
    %c0_i32_0 = arith.constant 0 : i32
    return %arg0, %c0_i32 : i32, i32
  }
  func.func @transform_1(%arg0: i32) -> (i32, i32) {
    %c0_i32 = arith.constant 0 : i32
    %c0_i32_0 = arith.constant 0 : i32
    %c0_i32_1 = arith.constant 0 : i32
    return %c0_i32, %c0_i32_0 : i32, i32
  }
  func.func @transform_2(%arg0: i32) -> (i32, i32) {
    %c0_i32 = arith.constant 0 : i32
    %c0_i32_0 = arith.constant 0 : i32
    %c0_i32_1 = arith.constant 0 : i32
    return %c0_i32, %c0_i32_0 : i32, i32
  }
  func.func @transform_3(%arg0: i32) -> (i32, i32) {
    %c0_i32 = arith.constant 0 : i32
    %c0_i32_0 = arith.constant 0 : i32
    %c0_i32_1 = arith.constant 0 : i32
    return %c0_i32, %c0_i32_0 : i32, i32
  }
  func.func @transform_4(%arg0: i32) -> (i32, i32) {
    %c0_i32 = arith.constant 0 : i32
    %c0_i32_0 = arith.constant 0 : i32
    %c0_i32_1 = arith.constant 0 : i32
    return %c0_i32, %c0_i32_0 : i32, i32
  }
  func.func @transform_5(%arg0: i32) -> (i32, i32) {
    %c0_i32 = arith.constant 0 : i32
    %c0_i32_0 = arith.constant 0 : i32
    %c0_i32_1 = arith.constant 0 : i32
    return %c0_i32, %c0_i32_0 : i32, i32
  }
  func.func @transform_6(%arg0: i32) -> (i32, i32) {
    %c0_i32 = arith.constant 0 : i32
    %c0_i32_0 = arith.constant 0 : i32
    %c0_i32_1 = arith.constant 0 : i32
    return %c0_i32, %c0_i32_0 : i32, i32
  }
  func.func @transform_7(%arg0: i32) -> (i32, i32) {
    %c0_i32 = arith.constant 0 : i32
    %c0_i32_0 = arith.constant 0 : i32
    %c0_i32_1 = arith.constant 0 : i32
    return %c0_i32, %c0_i32_0 : i32, i32
  }
  func.func @transform_8(%arg0: i32) -> (i32, i32) {
    %c0_i32 = arith.constant 0 : i32
    %c0_i32_0 = arith.constant 0 : i32
    %c0_i32_1 = arith.constant 0 : i32
    return %c0_i32, %c0_i32_0 : i32, i32
  }
  func.func @transform_9(%arg0: i32) -> (i32, i32) {
    %c0_i32 = arith.constant 0 : i32
    %c0_i32_0 = arith.constant 0 : i32
    return %arg0, %c0_i32 : i32, i32
  }
}

</mosaic_0001>

<llo_original>
// kernel: tpu_custom_call.1
$region0: #{tpu_custom_call.1}
  #allocation0 [shape = 'u32[]', space=smem, size = 0x4, offset = 0x4, fixed_abs, tag = 'smem constant byte address 0x4 - core index']
  #allocation1 [shape = 'u32[144,128]{1,0:T(1,128)}', space=vmem, size = 0x12000, scoped, tag = 'internal scratch']
  #allocation2 [shape = 'f32[1,1]{1,0:T(1,128)S(1)}', space=vmem, size = 0x200, scoped, tag = 'scoped memory for tpu_custom_call.1']
  %s0 = inlined_call_operand.vmem [shape: f32[2,1024], index: 0, kind: input, shape index: {}]
  %s1 = inlined_call_operand.vmem [shape: bf16[128,64], index: 1, kind: input, shape index: {}]
  %s2 = inlined_call_operand.vmem [shape: f32[1,64], index: 2, kind: input, shape index: {}]
  %s3 = inlined_call_operand.vmem [shape: bf16[64,32], index: 3, kind: input, shape index: {}]
  %s4 = inlined_call_operand.vmem [shape: f32[1,32], index: 4, kind: input, shape index: {}]
  %s5 = inlined_call_operand.vmem [shape: bf16[32,8], index: 5, kind: input, shape index: {}]
  %s6 = inlined_call_operand.vmem [shape: f32[1,8], index: 6, kind: input, shape index: {}]
  %s7 = inlined_call_operand.vmem [shape: f32[1,8], index: 7, kind: input, shape index: {}]
  %s8 = inlined_call_operand.<no memory space> [shape: f32[1,1], index: 8, kind: input, shape index: {}]
  %s9 = inlined_call_operand.vmem [shape: f32[2,1], index: 9, kind: output, shape index: {}]
  %s10 = sld [smem:[#allocation0]]
  $region46: #{tpu_custom_call.1} parent=0
    _
  %s12 = ssub.s32 1, %s10
  %s13 = scalar_select 0, %s12, %s10
  %v14 = vstv %s8
  %15 = vst [vmem:[#allocation2] sm:$0x1] %v14
  // Predicated region
  $region2: #{tpu_custom_call.1} parent=0 // pred_check
    _
  $region3: #{tpu_custom_call.1} parent=0 // pred_check_branch
    %17 = sbr.rel (0) target = $region5
  $region4: #{tpu_custom_call.1} parent=0 // pred_region
    _
  $region5: #{tpu_custom_call.1} parent=0 // pred_fallthru
    _
  // Predicated region
  $region6: #{tpu_custom_call.1} parent=0 // pred_check
    _
  $region7: #{tpu_custom_call.1} parent=0 // pred_check_branch
    %19 = sbr.rel (0) target = $region9
  $region8: #{tpu_custom_call.1} parent=0 // pred_region
    _
  $region9: #{tpu_custom_call.1} parent=0 // pred_fallthru
    _
  // Predicated region
  $region10: #{tpu_custom_call.1} parent=0 // pred_check
    _
  $region11: #{tpu_custom_call.1} parent=0 // pred_check_branch
    %21 = sbr.rel (0) target = $region13
  $region12: #{tpu_custom_call.1} parent=0 // pred_region
    _
  $region13: #{tpu_custom_call.1} parent=0 // pred_fallthru
    _
  // Predicated region
  $region14: #{tpu_custom_call.1} parent=0 // pred_check
    _
  $region15: #{tpu_custom_call.1} parent=0 // pred_check_branch
    %23 = sbr.rel (0) target = $region17
  $region16: #{tpu_custom_call.1} parent=0 // pred_region
    _
  $region17: #{tpu_custom_call.1} parent=0 // pred_fallthru
    _
  // Predicated region
  $region18: #{tpu_custom_call.1} parent=0 // pred_check
    _
  $region19: #{tpu_custom_call.1} parent=0 // pred_check_branch
    %25 = sbr.rel (0) target = $region21
  $region20: #{tpu_custom_call.1} parent=0 // pred_region
    _
  $region21: #{tpu_custom_call.1} parent=0 // pred_fallthru
    _
  // Predicated region
  $region22: #{tpu_custom_call.1} parent=0 // pred_check
    _
  $region23: #{tpu_custom_call.1} parent=0 // pred_check_branch
    %27 = sbr.rel (0) target = $region25
  $region24: #{tpu_custom_call.1} parent=0 // pred_region
    _
  $region25: #{tpu_custom_call.1} parent=0 // pred_fallthru
    _
  // Predicated region
  $region26: #{tpu_custom_call.1} parent=0 // pred_check
    _
  $region27: #{tpu_custom_call.1} parent=0 // pred_check_branch
    %29 = sbr.rel (0) target = $region29
  $region28: #{tpu_custom_call.1} parent=0 // pred_region
    _
  $region29: #{tpu_custom_call.1} parent=0 // pred_fallthru
    _
  // Predicated region
  $region30: #{tpu_custom_call.1} parent=0 // pred_check
    _
  $region31: #{tpu_custom_call.1} parent=0 // pred_check_branch
    %31 = sbr.rel (0) target = $region33
  $region32: #{tpu_custom_call.1} parent=0 // pred_region
    _
  $region33: #{tpu_custom_call.1} parent=0 // pred_fallthru
    _
  // Predicated region
  $region34: #{tpu_custom_call.1} parent=0 // pred_check
    _
  $region35: #{tpu_custom_call.1} parent=0 // pred_check_branch
    %33 = sbr.rel (0) target = $region37
  $region36: #{tpu_custom_call.1} parent=0 // pred_region
    _
  $region37: #{tpu_custom_call.1} parent=0 // pred_fallthru
    _
  %v35 = vld [vmem:[%s0] sm:$0x3]
  %v36 = vpack.c.bf16 %v35, %v35
  %v37 = vld [vmem:[%s1] sm:$0xf]
  %v38 = vld [vmem:[%s1 + $0x4] sm:$0xf]
  %v39 = vld [vmem:[%s1 + $0x8] sm:$0xf]
  %v40 = vld [vmem:[%s1 + $0xc] sm:$0xf]
  %v41 = vld [vmem:[%s1 + $0x10] sm:$0xf]
  %v42 = vld [vmem:[%s1 + $0x14] sm:$0xf]
  %v43 = vld [vmem:[%s1 + $0x18] sm:$0xf]
  %v44 = vld [vmem:[%s1 + $0x1c] sm:$0xf]
  %v45 = vld [vmem:[%s1 + $0x20] sm:$0xf]
  %v46 = vld [vmem:[%s1 + $0x24] sm:$0xf]
  %v47 = vld [vmem:[%s1 + $0x28] sm:$0xf]
  %v48 = vld [vmem:[%s1 + $0x2c] sm:$0xf]
  %v49 = vld [vmem:[%s1 + $0x30] sm:$0xf]
  %v50 = vld [vmem:[%s1 + $0x34] sm:$0xf]
  %v51 = vld [vmem:[%s1 + $0x38] sm:$0xf]
  %v52 = vld [vmem:[%s1 + $0x3c] sm:$0xf]
  %v53 = vld [vmem:[%s2] sm:$0x1]
  %v55 = vlaneseq
  %v56 = vshrl.u32 %v55, 7
  %v57 = vsub.s32 0, %v56
  %v58 = vrot.slane %v53, %v57
  %v76 = vunpack.c.l.b16 %v37
  %v77 = vunpack.c.l.b16 %v38
  %v78 = vunpack.c.l.b16 %v39
  %v79 = vunpack.c.l.b16 %v40
  %v80 = vunpack.c.l.b16 %v41
  %v81 = vunpack.c.l.b16 %v42
  %v82 = vunpack.c.l.b16 %v43
  %v83 = vunpack.c.l.b16 %v44
  %v84 = vunpack.c.l.b16 %v45
  %v85 = vunpack.c.l.b16 %v46
  %v86 = vunpack.c.l.b16 %v47
  %v87 = vunpack.c.l.b16 %v48
  %v88 = vunpack.c.l.b16 %v49
  %v89 = vunpack.c.l.b16 %v50
  %v90 = vunpack.c.l.b16 %v51
  %v91 = vunpack.c.l.b16 %v52
  %v92 = vpack.c.b16 %v77, %v76
  %v93 = vpack.c.b16 %v79, %v78
  %v94 = vpack.c.b16 %v81, %v80
  %v95 = vpack.c.b16 %v83, %v82
  %v96 = vpack.c.b16 %v85, %v84
  %v97 = vpack.c.b16 %v87, %v86
  %v98 = vpack.c.b16 %v89, %v88
  %v99 = vpack.c.b16 %v91, %v90
  %108 = vmatprep.subr.bf16.mxu0 0
  %109 = vmatpush1.bf16.msra.mxu0 %v92
  %110 = vmatprep.subr.bf16.mxu0 0
  %111 = vmatpush1.bf16.msra.mxu0 %v93
  %112 = vmatprep.subr.bf16.mxu0 0
  %113 = vmatpush1.bf16.msra.mxu0 %v94
  %114 = vmatprep.subr.bf16.mxu0 0
  %115 = vmatpush1.bf16.msra.mxu0 %v95
  %116 = vmatprep.subr.bf16.mxu0 0
  %117 = vmatpush1.bf16.msra.mxu0 %v96
  %118 = vmatprep.subr.bf16.mxu0 0
  %119 = vmatpush1.bf16.msra.mxu0 %v97
  %120 = vmatprep.subr.bf16.mxu0 0
  %121 = vmatpush1.bf16.msra.mxu0 %v98
  %122 = vmatprep.subr.bf16.mxu0 0
  %123 = vmatpush1.bf16.msra.mxu0 %v99
  %124 = vmatprep.subr.bf16.mxu0 0
  %125 = vmatpush1.bf16.msra.mxu0 0
  %126 = vmatprep.subr.bf16.mxu0 0
  %127 = vmatpush1.bf16.msra.mxu0 0
  %128 = vmatprep.subr.bf16.mxu0 0
  %129 = vmatpush1.bf16.msra.mxu0 0
  %130 = vmatprep.subr.bf16.mxu0 0
  %131 = vmatpush1.bf16.msra.mxu0 0
  %132 = vmatprep.subr.bf16.mxu0 0
  %133 = vmatpush1.bf16.msra.mxu0 0
  %134 = vmatprep.subr.bf16.mxu0 0
  %135 = vmatpush1.bf16.msra.mxu0 0
  %136 = vmatprep.subr.bf16.mxu0 0
  %137 = vmatpush1.bf16.msra.mxu0 0
  %138 = vmatprep.subr.bf16.mxu0 0
  %139 = vmatpush1.bf16.msra.mxu0 0
  %140 = vmatprep.mubr.bf16.mxu0 0
  %141 = vmatmul.mubr.bf16.gmra.mrb[0].mxu0 %v36
  %v142 = vpop.f32.mrb[0].mxu0
  %v143 = vadd.f32 %v58, %v142
  %v144 = vpop.f32.mrb[0].mxu0
  %v145 = vpop.f32.mrb[0].mxu0
  %v146 = vpop.f32.mrb[0].mxu0
  %147 = vdwg.mxu0
  %v148 = vmax.f32 %v143, 0.0
  %v149 = vpack.c.bf16 %v148, %v148
  %v150 = vld [vmem:[%s3] sm:$0xf]
  %v151 = vld [vmem:[%s3 + $0x4] sm:$0xf]
  %v152 = vld [vmem:[%s3 + $0x8] sm:$0xf]
  %v153 = vld [vmem:[%s3 + $0xc] sm:$0xf]
  %v154 = vld [vmem:[%s3 + $0x10] sm:$0xf]
  %v155 = vld [vmem:[%s3 + $0x14] sm:$0xf]
  %v156 = vld [vmem:[%s3 + $0x18] sm:$0xf]
  %v157 = vld [vmem:[%s3 + $0x1c] sm:$0xf]
  %v158 = vld [vmem:[%s4] sm:$0x1]
  %v160 = vlaneseq
  %v161 = vshrl.u32 %v160, 7
  %v162 = vsub.s32 0, %v161
  %v163 = vrot.slane %v158, %v162
  %v173 = vunpack.c.l.b16 %v150
  %v174 = vunpack.c.l.b16 %v151
  %v175 = vunpack.c.l.b16 %v152
  %v176 = vunpack.c.l.b16 %v153
  %v177 = vunpack.c.l.b16 %v154
  %v178 = vunpack.c.l.b16 %v155
  %v179 = vunpack.c.l.b16 %v156
  %v180 = vunpack.c.l.b16 %v157
  %v181 = vpack.c.b16 %v174, %v173
  %v182 = vpack.c.b16 %v176, %v175
  %v183 = vpack.c.b16 %v178, %v177
  %v184 = vpack.c.b16 %v180, %v179
  %vm189 = vcmask 523264
  %v191 = vsel %vm189, %v149, 0
  %193 = vmatprep.subr.bf16.mxu0 0
  %194 = vmatpush1.bf16.msra.mxu0 %v181
  %195 = vmatprep.subr.bf16.mxu0 0
  %196 = vmatpush1.bf16.msra.mxu0 %v182
  %197 = vmatprep.subr.bf16.mxu0 0
  %198 = vmatpush1.bf16.msra.mxu0 %v183
  %199 = vmatprep.subr.bf16.mxu0 0
  %200 = vmatpush1.bf16.msra.mxu0 %v184
  %201 = vmatprep.subr.bf16.mxu0 0
  %202 = vmatpush1.bf16.msra.mxu0 0
  %203 = vmatprep.subr.bf16.mxu0 0
  %204 = vmatpush1.bf16.msra.mxu0 0
  %205 = vmatprep.subr.bf16.mxu0 0
  %206 = vmatpush1.bf16.msra.mxu0 0
  %207 = vmatprep.subr.bf16.mxu0 0
  %208 = vmatpush1.bf16.msra.mxu0 0
  %209 = vmatprep.subr.bf16.mxu0 0
  %210 = vmatpush1.bf16.msra.mxu0 0
  %211 = vmatprep.subr.bf16.mxu0 0
  %212 = vmatpush1.bf16.msra.mxu0 0
  %213 = vmatprep.subr.bf16.mxu0 0
  %214 = vmatpush1.bf16.msra.mxu0 0
  %215 = vmatprep.subr.bf16.mxu0 0
  %216 = vmatpush1.bf16.msra.mxu0 0
  %217 = vmatprep.subr.bf16.mxu0 0
  %218 = vmatpush1.bf16.msra.mxu0 0
  %219 = vmatprep.subr.bf16.mxu0 0
  %220 = vmatpush1.bf16.msra.mxu0 0
  %221 = vmatprep.subr.bf16.mxu0 0
  %222 = vmatpush1.bf16.msra.mxu0 0
  %223 = vmatprep.subr.bf16.mxu0 0
  %224 = vmatpush1.bf16.msra.mxu0 0
  %225 = vmatprep.mubr.bf16.mxu0 0
  %226 = vmatmul.mubr.bf16.gmra.mrb[0].mxu0 %v191
  %v227 = vpop.f32.mrb[0].mxu0
  %v228 = vadd.f32 %v163, %v227
  %v229 = vpop.f32.mrb[0].mxu0
  %v230 = vpop.f32.mrb[0].mxu0
  %v231 = vpop.f32.mrb[0].mxu0
  %232 = vdwg.mxu0
  %v233 = vmax.f32 %v228, 0.0
  %v234 = vpack.c.bf16 %v233, %v233
  %v235 = vld [vmem:[%s5] sm:$0xf]
  %v236 = vld [vmem:[%s5 + $0x4] sm:$0xf]
  %v237 = vld [vmem:[%s5 + $0x8] sm:$0xf]
  %v238 = vld [vmem:[%s5 + $0xc] sm:$0xf]
  %v239 = vld [vmem:[%s6] sm:$0x1]
  %v241 = vlaneseq
  %v242 = vshrl.u32 %v241, 7
  %v243 = vsub.s32 0, %v242
  %v244 = vrot.slane %v239, %v243
  %v250 = vunpack.c.l.b16 %v235
  %v251 = vunpack.c.l.b16 %v236
  %v252 = vunpack.c.l.b16 %v237
  %v253 = vunpack.c.l.b16 %v238
  %v254 = vpack.c.b16 %v251, %v250
  %v255 = vpack.c.b16 %v253, %v252
  %vm258 = vcmask 261120
  %v260 = vsel %vm258, %v234, 0
  %262 = vmatprep.subr.bf16.mxu0 0
  %263 = vmatpush1.bf16.msra.mxu0 %v254
  %264 = vmatprep.subr.bf16.mxu0 0
  %265 = vmatpush1.bf16.msra.mxu0 %v255
  %266 = vmatprep.subr.bf16.mxu0 0
  %267 = vmatpush1.bf16.msra.mxu0 0
  %268 = vmatprep.subr.bf16.mxu0 0
  %269 = vmatpush1.bf16.msra.mxu0 0
  %270 = vmatprep.subr.bf16.mxu0 0
  %271 = vmatpush1.bf16.msra.mxu0 0
  %272 = vmatprep.subr.bf16.mxu0 0
  %273 = vmatpush1.bf16.msra.mxu0 0
  %274 = vmatprep.subr.bf16.mxu0 0
  %275 = vmatpush1.bf16.msra.mxu0 0
  %276 = vmatprep.subr.bf16.mxu0 0
  %277 = vmatpush1.bf16.msra.mxu0 0
  %278 = vmatprep.subr.bf16.mxu0 0
  %279 = vmatpush1.bf16.msra.mxu0 0
  %280 = vmatprep.subr.bf16.mxu0 0
  %281 = vmatpush1.bf16.msra.mxu0 0
  %282 = vmatprep.subr.bf16.mxu0 0
  %283 = vmatpush1.bf16.msra.mxu0 0
  %284 = vmatprep.subr.bf16.mxu0 0
  %285 = vmatpush1.bf16.msra.mxu0 0
  %286 = vmatprep.subr.bf16.mxu0 0
  %287 = vmatpush1.bf16.msra.mxu0 0
  %288 = vmatprep.subr.bf16.mxu0 0
  %289 = vmatpush1.bf16.msra.mxu0 0
  %290 = vmatprep.subr.bf16.mxu0 0
  %291 = vmatpush1.bf16.msra.mxu0 0
  %292 = vmatprep.subr.bf16.mxu0 0
  %293 = vmatpush1.bf16.msra.mxu0 0
  %294 = vmatprep.mubr.bf16.mxu0 0
  %295 = vmatmul.mubr.bf16.gmra.mrb[0].mxu0 %v260
  %v296 = vpop.f32.mrb[0].mxu0
  %v297 = vadd.f32 %v244, %v296
  %v298 = vpop.f32.mrb[0].mxu0
  %v299 = vpop.f32.mrb[0].mxu0
  %v300 = vpop.f32.mrb[0].mxu0
  %301 = vdwg.mxu0
  %v302 = vmax.f32 %v297, 0.0
  %v303 = vld [vmem:[%s7] sm:$0x1]
  %v305 = vlaneseq
  %v306 = vshrl.u32 %v305, 7
  %v307 = vsub.s32 0, %v306
  %v308 = vrot.slane %v303, %v307
  %v310 = vmul.f32 %v302, %v308
  %vm311 = vcmask 58368
  %v312 = vsel %vm311, %v310, 0.0
  %313 = vadd.xlane.f32.xlu0 %v312
  %v314 = vpop.xlane.xlu0 %313
  %v315 = vld [vmem:[#allocation2] sm:$0x1]
  %v317 = vlaneseq
  %v318 = vshrl.u32 %v317, 7
  %v319 = vsub.s32 0, %v318
  %v320 = vrot.slane %v315, %v319
  %v322 = vadd.f32 %v314, %v320
  %vm323 = vcmask 1024
  %324 = vst.msk [vmem:[%s9] sm:$0x3] %vm323, %v322
  // Predicated region
  $region38: #{tpu_custom_call.1} parent=0 // pred_check
    _
  $region39: #{tpu_custom_call.1} parent=0 // pred_check_branch
    %326 = sbr.rel (0) target = $region41
  $region40: #{tpu_custom_call.1} parent=0 // pred_region
    _
  $region41: #{tpu_custom_call.1} parent=0 // pred_fallthru
    _
  // Predicated region
  $region42: #{tpu_custom_call.1} parent=0 // pred_check
    _
  $region43: #{tpu_custom_call.1} parent=0 // pred_check_branch
    %328 = sbr.rel (0) target = $region45
  $region44: #{tpu_custom_call.1} parent=0 // pred_region
    _
  $region45: #{tpu_custom_call.1} parent=0 // pred_fallthru
    _

</llo_original>
